<compile_context>
chip_gen: v5e
topology: v5e:2x2
jax: 0.10.0
libtpu: 0.0.40
codegen_flags: <defaults>
</compile_context>

<pallas_src>
import math
import functools

import jax
import jax.numpy as jnp
from jax.experimental import pallas as pl
from jax.experimental.pallas import tpu as pltpu


# ----------------------------- Pallas kernels ------------------------------ #

def _pe_add_kernel(x_ref, pe_ref, o_ref):
    # x_ref: (tS, B, D), pe_ref: (tS, 1, D) -> broadcast add over batch axis.
    o_ref[...] = x_ref[...] + pe_ref[...].astype(x_ref.dtype)


def _pe_add_dropout_kernel(x_ref, pe_ref, bits_ref, o_ref, *, threshold, inv_keep):
    # Training path: add PE, then inverted dropout.
    # keep iff uniform uint32 >= threshold  (P(keep) = 1 - p), scale by 1/(1-p).
    y = x_ref[...] + pe_ref[...].astype(x_ref.dtype)
    keep = bits_ref[...] >= jnp.uint32(threshold)
    scaled = y * jnp.asarray(inv_keep, y.dtype)
    o_ref[...] = jnp.where(keep, scaled, jnp.zeros_like(y))


# ------------------------------ Param setup -------------------------------- #

def make_positional_encoding_table(d_model, max_len=5000, dtype=jnp.float32):
    """Deterministic `pe` buffer, identical to the PyTorch __init__ math.

    Built once, in the model dtype, so the forward pass never re-slices or
    re-casts it.
    """
    position = jnp.arange(max_len, dtype=jnp.float32)[:, None]          # (L, 1)
    div_term = jnp.exp(
        jnp.arange(0, d_model, 2, dtype=jnp.float32)
        * -(math.log(10000.0) / d_model)
    )                                                                    # (D/2,)
    pe = jnp.zeros((max_len, 1, d_model), dtype=jnp.float32)
    pe = pe.at[:, 0, 0::2].set(jnp.sin(position * div_term))
    pe = pe.at[:, 0, 1::2].set(jnp.cos(position * div_term))
    return pe.astype(dtype)


# ----------------------------- Tile selection ------------------------------- #

def _default_s_tile(S, B, D, itemsize, target_bytes=2 << 20):
    """Largest S-tile such that one x/out tile is ~<= 2 MiB.

    With x + out (+ bits in training) double-buffered this stays well under
    the 16 MiB v5e scoped-VMEM default and the 64 MiB v7x physical VMEM,
    while being large enough (~2 MiB) to sit on the measured HBM-roofline
    plateau for mem-bound elementwise kernels.
    """
    row_bytes = max(B * D * itemsize, 1)
    t = max(1, target_bytes // row_bytes)
    if t >= 8:
        t = (t // 8) * 8
    return int(min(S, t))


# -------------------------------- Wrapper ----------------------------------- #

def positional_encoding_forward(x, pe, *, dropout_p=0.1, train=False,
                                rng_key=None, s_tile=None):
    """Forward pass of PositionalEncoding: x + pe[:S], then dropout.

    x : (S, B, D)
    pe: (max_len, 1, D)   -- full table; rows [0, S) are selected via BlockSpec
    """
    S, B, D = x.shape
    assert pe.shape[0] >= S and pe.shape[1] == 1 and pe.shape[2] == D

    if s_tile is None:
        s_tile = _default_s_tile(S, B, D, jnp.dtype(x.dtype).itemsize)
    s_tile = int(min(s_tile, S))
    grid = (pl.cdiv(S, s_tile),)

    x_spec = pl.BlockSpec((s_tile, B, D), lambda i: (i, 0, 0))
    pe_spec = pl.BlockSpec((s_tile, 1, D), lambda i: (i, 0, 0))
    out_spec = pl.BlockSpec((s_tile, B, D), lambda i: (i, 0, 0))
    cparams = pltpu.CompilerParams(dimension_semantics=("parallel",))

    if (not train) or dropout_p == 0.0:
        # eval mode: dropout is identity
        return pl.pallas_call(
            _pe_add_kernel,
            out_shape=jax.ShapeDtypeStruct((S, B, D), x.dtype),
            grid=grid,
            in_specs=[x_spec, pe_spec],
            out_specs=out_spec,
            compiler_params=cparams,
        )(x, pe)

    # training mode: inverted dropout with host-generated random bits.
    if rng_key is None:
        rng_key = jax.random.PRNGKey(0)
    bits = jax.random.bits(rng_key, (S, B, D), dtype=jnp.uint32)

    p = float(dropout_p)
    threshold = min(int(round(p * float(1 << 32))), (1 << 32) - 1)
    inv_keep = 1.0 / (1.0 - p)
    kernel = functools.partial(_pe_add_dropout_kernel,
                               threshold=threshold, inv_keep=inv_keep)
    bits_spec = pl.BlockSpec((s_tile, B, D), lambda i: (i, 0, 0))

    return pl.pallas_call(
        kernel,
        out_shape=jax.ShapeDtypeStruct((S, B, D), x.dtype),
        grid=grid,
        in_specs=[x_spec, pe_spec, bits_spec],
        out_specs=out_spec,
        compiler_params=cparams,
    )(x, pe, bits)


# --------------------------------- Main ------------------------------------- #

if __name__ == "__main__":
    d_model = 128     # lane dimension: multiple of 128 -> unmasked stores
    seq_len = 64
    batch = 8
    max_len = 256     # > seq_len, consistent with module semantics
    dropout_p = 0.1

    key = jax.random.PRNGKey(0)
    k_x, k_drop = jax.random.split(key)
    x = jax.random.normal(k_x, (seq_len, batch, d_model), dtype=jnp.float32)

    pe = make_positional_encoding_table(d_model, max_len=max_len, dtype=x.dtype)

    # eval-mode forward (dropout = identity); force a multi-step grid (4 tiles)
    y_eval = positional_encoding_forward(x, pe, dropout_p=dropout_p,
                                         train=False, s_tile=16)
    y_eval = jax.block_until_ready(y_eval)

    y_ref = x + pe[:seq_len]
    assert y_eval.shape == (seq_len, batch, d_model)
    assert jnp.allclose(y_eval, y_ref, atol=1e-6, rtol=1e-6)

    # training-mode forward (exercise the dropout kernel)
    y_train = positional_encoding_forward(x, pe, dropout_p=dropout_p,
                                          train=True, rng_key=k_drop, s_tile=16)
    y_train = jax.block_until_ready(y_train)
    assert y_train.shape == (seq_len, batch, d_model)

    # every element is either dropped (0) or equal to (x + pe) / (1 - p)
    scale = 1.0 / (1.0 - dropout_p)
    expected = y_ref * scale
    tol = 1e-5 * jnp.maximum(1.0, jnp.abs(expected))
    ok = jnp.all((y_train == 0) | (jnp.abs(y_train - expected) <= tol))
    assert bool(ok)
    drop_frac = float(jnp.mean((y_train == 0).astype(jnp.float32)))
    assert 0.0 < drop_frac < 0.5  # ~dropout_p of elements dropped

    print("KERNEL_OK")
</pallas_src>

<mosaic_0001>
module attributes {stable_mosaic.version = 11 : i64} {
  func.func @_pe_add_kernel(%arg0: i32, %arg1: memref<16x8x128xf32, #tpu.memory_space<vmem>>, %arg2: memref<16x1x128xf32, #tpu.memory_space<vmem>>, %arg3: memref<16x8x128xf32, #tpu.memory_space<vmem>>) attributes {dimension_semantics = [#tpu.dimension_semantics<parallel>], iteration_bounds = array<i64: 4>, scalar_prefetch = 0 : i64, scratch_operands = 0 : i64, tpu.core_type = #tpu.core_type<tc>, window_params = [{transform_indices = @transform_0, window_bounds = array<i64: 16, 8, 128>}, {transform_indices = @transform_1, window_bounds = array<i64: 16, 1, 128>}, {transform_indices = @transform_2, window_bounds = array<i64: 16, 8, 128>}]} {
    %c0 = arith.constant 0 : index
    %c0_0 = arith.constant 0 : index
    %c0_1 = arith.constant 0 : index
    %0 = vector.load %arg1[%c0, %c0_0, %c0_1] : memref<16x8x128xf32, #tpu.memory_space<vmem>>, vector<16x8x128xf32>
    %c0_2 = arith.constant 0 : index
    %c0_3 = arith.constant 0 : index
    %c0_4 = arith.constant 0 : index
    %1 = vector.load %arg2[%c0_2, %c0_3, %c0_4] : memref<16x1x128xf32, #tpu.memory_space<vmem>>, vector<16x1x128xf32>
    %2 = vector.broadcast %1 : vector<16x1x128xf32> to vector<16x8x128xf32>
    %3 = arith.addf %0, %2 : vector<16x8x128xf32>
    %c0_5 = arith.constant 0 : index
    %c0_6 = arith.constant 0 : index
    %c0_7 = arith.constant 0 : index
    %4 = vector.load %arg3[%c0_5, %c0_6, %c0_7] : memref<16x8x128xf32, #tpu.memory_space<vmem>>, vector<16x8x128xf32>
    tpu.vector_store %arg3[%c0_5, %c0_6, %c0_7], %3 {strides = array<i32>} : memref<16x8x128xf32, #tpu.memory_space<vmem>>, vector<16x8x128xf32>,
    return
  }
  func.func @transform_0(%arg0: i32) -> (i32, i32, i32) {
    %c0_i32 = arith.constant 0 : i32
    %c0_i32_0 = arith.constant 0 : i32
    %c0_i32_1 = arith.constant 0 : i32
    return %arg0, %c0_i32, %c0_i32_0 : i32, i32, i32
  }
  func.func @transform_1(%arg0: i32) -> (i32, i32, i32) {
    %c0_i32 = arith.constant 0 : i32
    %c0_i32_0 = arith.constant 0 : i32
    %c0_i32_1 = arith.constant 0 : i32
    return %arg0, %c0_i32, %c0_i32_0 : i32, i32, i32
  }
  func.func @transform_2(%arg0: i32) -> (i32, i32, i32) {
    %c0_i32 = arith.constant 0 : i32
    %c0_i32_0 = arith.constant 0 : i32
    %c0_i32_1 = arith.constant 0 : i32
    return %arg0, %c0_i32, %c0_i32_0 : i32, i32, i32
  }
}

</mosaic_0001>

<llo_original>
// kernel: tpu_custom_call.1
$region0: #{tpu_custom_call.1}
  #allocation0 [shape = 'u32[]', space=smem, size = 0x4, offset = 0x4, fixed_abs, tag = 'smem constant byte address 0x4 - core index']
  #allocation1 [shape = 'u32[72,128]{1,0:T(1,128)}', space=vmem, size = 0x9000, scoped, tag = 'internal scratch']
  %s0 = inlined_call_operand.hbm [shape: f32[64,8,128], index: 0, kind: input, shape index: {}]
  %s1 = inlined_call_operand.hbm [shape: f32[256,1,128], index: 1, kind: input, shape index: {}]
  %s2 = inlined_call_operand.hbm [shape: f32[64,8,128], index: 2, kind: output, shape index: {}]
  %s3 = sld [smem:[#allocation0]]
  $region49: #{tpu_custom_call.1} parent=0
    _
  %s5 = ssub.s32 1, %s3
  %s6 = scalar_select 0, %s5, %s3
  $region1: #{tpu_custom_call.1} parent=0
    #allocation2 [shape = 'u8[131072]{0}', space=vmem, size = 0x20000, scoped, tag = 'input window, operand 0']
    #allocation3 [shape = 's32[2]{0}', space=sflag, size = 0x8, scoped, tag = 'scoped memory for tpu_custom_call.1']
    #allocation4 [shape = 's32[2]{0}', space=sflag, size = 0x8, scoped, tag = 'scoped memory for tpu_custom_call.1']
    #allocation5 [shape = 'u8[16384]{0}', space=vmem, size = 0x4000, scoped, tag = 'input window, operand 1']
    #allocation6 [shape = 's32[2]{0}', space=sflag, size = 0x8, scoped, tag = 'scoped memory for tpu_custom_call.1']
    #allocation7 [shape = 'u8[131072]{0}', space=vmem, size = 0x20000, scoped, tag = 'output window, operand 0']
    %7 = vsyncpa [#allocation3], 0
    %s8 = scalar_lea.sflag [#allocation3], 1
    %9 = vsyncpa %s8, 0
    %10 = vsyncpa [#allocation6], 0
    %s11 = scalar_lea.sflag [#allocation6], 1
    %12 = vsyncpa %s11, 0
    %13 = vsyncpa [#allocation4], 0
    %s14 = scalar_lea.sflag [#allocation4], 1
    %15 = vsyncpa %s14, 0
    loop: start=0, step=1, limit=6
    $region2: #{tpu_custom_call.1} parent=1 // loop_pre_header
      _
    $region3: #{tpu_custom_call.1} parent=1 // loop_header
      %s17 = sphi 0, %s21
      %p18 = scmp.ge.s32.totalorder %s17, 6
      %s27 = sphi 0, %s29
      %s30 = sphi 0, %s27
      %s31 = sphi 0, %s30
      %s47 = sphi 0, %s31
      %s53 = sphi 0, %s55
      %s56 = sphi 0, %s53
      %s57 = sphi 0, %s56
      %s73 = sphi 0, %s57
      %s79 = sphi 0, %s81
      %s82 = sphi 0, %s79
      %s83 = sphi 0, %s82
      %s99 = sphi 0, %s83
    $region4: #{tpu_custom_call.1} parent=1 // loop_header_branch
      %20 = sbr.rel (%p18) target = $region8
    $region5: #{tpu_custom_call.1} parent=1 // loop_body
      %s22 = ssub.s32 %s17, 1
      %s23 = ssub.s32 %s17, 2
      %s24 = sadd.s32 %s17, 1
      %s25 = ssub.s32 %s17, %s24
      %p26 = scmp.eq.s32.totalorder %s25, 0
      %s28 = sadd.s32 %s27, 1
      %s29 = scalar_select %p26, %s27, %s28
      %p32 = pneg %p26
      %p33 = scmp.eq.s32.totalorder %s17, 3
      %p34 = por %p32, %p33
      %p35 = scmp.ne.s32.totalorder %s27, %s30
      %p36 = scmp.eq.s32.totalorder %s17, 0
      %p37 = por %p35, %p36
      %p38 = scmp.ne.s32.totalorder %s27, %s30
      %p39 = scmp.eq.s32.totalorder %s22, 3
      %p40 = por %p38, %p39
      %p41 = scmp.ne.s32.totalorder %s30, %s31
      %p42 = scmp.eq.s32.totalorder %s22, 0
      %p43 = por %p41, %p42
      %p44 = scmp.ne.s32.totalorder %s30, %s31
      %p45 = scmp.eq.s32.totalorder %s23, 3
      %p46 = por %p44, %p45
      %p48 = scmp.ne.s32.totalorder %s31, %s47
      %p49 = scmp.eq.s32.totalorder %s23, 0
      %p50 = por %p48, %p49
      %s51 = ssub.s32 %s17, %s24
      %p52 = scmp.eq.s32.totalorder %s51, 0
      %s54 = sadd.s32 %s53, 1
      %s55 = scalar_select %p52, %s53, %s54
      %p58 = pneg %p52
      %p59 = scmp.eq.s32.totalorder %s17, 3
      %p60 = por %p58, %p59
      %p61 = scmp.ne.s32.totalorder %s53, %s56
      %p62 = scmp.eq.s32.totalorder %s17, 0
      %p63 = por %p61, %p62
      %p64 = scmp.ne.s32.totalorder %s53, %s56
      %p65 = scmp.eq.s32.totalorder %s22, 3
      %p66 = por %p64, %p65
      %p67 = scmp.ne.s32.totalorder %s56, %s57
      %p68 = scmp.eq.s32.totalorder %s22, 0
      %p69 = por %p67, %p68
      %p70 = scmp.ne.s32.totalorder %s56, %s57
      %p71 = scmp.eq.s32.totalorder %s23, 3
      %p72 = por %p70, %p71
      %p74 = scmp.ne.s32.totalorder %s57, %s73
      %p75 = scmp.eq.s32.totalorder %s23, 0
      %p76 = por %p74, %p75
      %s77 = ssub.s32 %s17, %s24
      %p78 = scmp.eq.s32.totalorder %s77, 0
      %s80 = sadd.s32 %s79, 1
      %s81 = scalar_select %p78, %s79, %s80
      %p84 = pneg %p78
      %p85 = scmp.eq.s32.totalorder %s17, 3
      %p86 = por %p84, %p85
      %p87 = scmp.ne.s32.totalorder %s79, %s82
      %p88 = scmp.eq.s32.totalorder %s17, 0
      %p89 = por %p87, %p88
      %p90 = scmp.ne.s32.totalorder %s79, %s82
      %p91 = scmp.eq.s32.totalorder %s22, 3
      %p92 = por %p90, %p91
      %p93 = scmp.ne.s32.totalorder %s82, %s83
      %p94 = scmp.eq.s32.totalorder %s22, 0
      %p95 = por %p93, %p94
      %p96 = scmp.ne.s32.totalorder %s82, %s83
      %p97 = scmp.eq.s32.totalorder %s23, 3
      %p98 = por %p96, %p97
      %p100 = scmp.ne.s32.totalorder %s83, %s99
      %p101 = scmp.eq.s32.totalorder %s23, 0
      %p102 = por %p100, %p101
      %p103 = scmp.le.s32.totalorder 1, %s17
      %p104 = scmp.lt.s32.totalorder %s17, 5
      %p105 = pnand %p103, %p104
      %p106 = pneg %p105
      // Predicated region
      $region9: #{tpu_custom_call.1} parent=5 // pred_check
        _
      $region10: #{tpu_custom_call.1} parent=5 // pred_check_branch
        %108 = sbr.rel (%p105) target = $region12
      $region11: #{tpu_custom_call.1} parent=5 // pred_region
        %s109 = ssub.s32 %s17, 1
      $region12: #{tpu_custom_call.1} parent=5 // pred_fallthru
        _
      %p110 = scmp.lt.s32.totalorder %s17, 4
      // Predicated region
      $region13: #{tpu_custom_call.1} parent=5 // pred_check
        %p111 = pneg %p110
      $region14: #{tpu_custom_call.1} parent=5 // pred_check_branch
        %113 = sbr.rel (%p111) target = $region16
      $region15: #{tpu_custom_call.1} parent=5 // pred_region
        // Predicated region
        $region17: #{tpu_custom_call.1} parent=15 // pred_check
          %p114 = pneg %p37
        $region18: #{tpu_custom_call.1} parent=15 // pred_check_branch
          %116 = sbr.rel (%p114) target = $region20
        $region19: #{tpu_custom_call.1} parent=15 // pred_region
          %s117 = sand.u32 %s27, 1
          %s118 = scalar_lea.sflag [#allocation3], %s117
          %s119 = sand.u32 %s27, 1
          %s120 = smul.addr %s119, 128
          %s121 = scalar_lea.vmem [#allocation2], %s120
          %s122 = smul.u32 16, %s17
          %124 = vsyncadd %s118, 0
          %s125 = smul.addr %s122, 8
          %s126 = scalar_lea.hbm %s0, %s125
          %s127 = sshll.u32 %s126, 4
          %s128 = int_to_ptr.hbm [resolvable:$true] %s127
          %s129 = sshll.u32 %s121, 4
          %s130 = int_to_ptr.vmem [resolvable:$true] %s129
          %135 = dma.hbm_to_vmem [thread:$0]  %s128, 2048, %s130, %s118, 128, 128, 8
        $region20: #{tpu_custom_call.1} parent=15 // pred_fallthru
          _
        // Predicated region
        $region21: #{tpu_custom_call.1} parent=15 // pred_check
          %p136 = pneg %p63
        $region22: #{tpu_custom_call.1} parent=15 // pred_check_branch
          %138 = sbr.rel (%p136) target = $region24
        $region23: #{tpu_custom_call.1} parent=15 // pred_region
          %s139 = sand.u32 %s53, 1
          %s140 = scalar_lea.sflag [#allocation6], %s139
          %s141 = sand.u32 %s53, 1
          %s142 = smul.addr %s141, 16
          %s143 = scalar_lea.vmem [#allocation5], %s142
          %s144 = smul.u32 16, %s17
          %146 = vsyncadd %s140, 0
          %s147 = scalar_lea.hbm %s1, %s144
          %s148 = sshll.u32 %s147, 4
          %s149 = int_to_ptr.hbm [resolvable:$true] %s148
          %s150 = sshll.u32 %s143, 4
          %s151 = int_to_ptr.vmem [resolvable:$true] %s150
          %156 = dma.hbm_to_vmem [thread:$0]  %s149, 256, %s151, %s140, 16, 16, 1
        $region24: #{tpu_custom_call.1} parent=15 // pred_fallthru
          _
      $region16: #{tpu_custom_call.1} parent=5 // pred_fallthru
        _
      %p157 = scmp.le.s32.totalorder 1, %s17
      %p158 = scmp.lt.s32.totalorder %s17, 5
      %p159 = pnand %p157, %p158
      %p160 = pneg %p159
      // Predicated region
      $region25: #{tpu_custom_call.1} parent=5 // pred_check
        _
      $region26: #{tpu_custom_call.1} parent=5 // pred_check_branch
        %162 = sbr.rel (%p159) target = $region28
      $region27: #{tpu_custom_call.1} parent=5 // pred_region
        %s163 = ssub.s32 %s17, 1
        %s164 = sand.u32 %s30, 1
        %s165 = scalar_lea.sflag [#allocation3], %s164
        %s166 = sand.u32 %s30, 1
        %s167 = smul.addr %s166, 128
        %s168 = scalar_lea.vmem [#allocation2], %s167
        // Predicated region
        $region29: #{tpu_custom_call.1} parent=27 // pred_check
          %p169 = pneg %p43
        $region30: #{tpu_custom_call.1} parent=27 // pred_check_branch
          %171 = sbr.rel (%p169) target = $region32
        $region31: #{tpu_custom_call.1} parent=27 // pred_region
          %173 = dma.done %s165, 2048
        $region32: #{tpu_custom_call.1} parent=27 // pred_fallthru
          _
        %s174 = sand.u32 %s56, 1
        %s175 = scalar_lea.sflag [#allocation6], %s174
        %s176 = sand.u32 %s56, 1
        %s177 = smul.addr %s176, 16
        %s178 = scalar_lea.vmem [#allocation5], %s177
        // Predicated region
        $region33: #{tpu_custom_call.1} parent=27 // pred_check
          %p179 = pneg %p69
        $region34: #{tpu_custom_call.1} parent=27 // pred_check_branch
          %181 = sbr.rel (%p179) target = $region36
        $region35: #{tpu_custom_call.1} parent=27 // pred_region
          %183 = dma.done %s175, 256
        $region36: #{tpu_custom_call.1} parent=27 // pred_fallthru
          _
        %s184 = sand.u32 %s30, 1
        %s185 = scalar_lea.sflag [#allocation3], %s184
        %s186 = sand.u32 %s30, 1
        %s187 = smul.addr %s186, 128
        %s188 = scalar_lea.vmem [#allocation2], %s187
        %p189 = pneg %p43
        %p190 = pneg %p40
        %s191 = sand.u32 %s56, 1
        %s192 = scalar_lea.sflag [#allocation6], %s191
        %s193 = sand.u32 %s56, 1
        %s194 = smul.addr %s193, 16
        %s195 = scalar_lea.vmem [#allocation5], %s194
        %p196 = pneg %p69
        %p197 = pneg %p66
        %p198 = pneg %p95
        %p199 = pneg %p92
        %s200 = sand.u32 %s82, 1
        %s201 = scalar_lea.sflag [#allocation4], %s200
        %s202 = sand.u32 %s82, 1
        %s203 = smul.addr %s202, 128
        %s204 = scalar_lea.vmem [#allocation7], %s203
        %s205 = smul.u32 16, %s22
        %s206 = smul.u32 16, %s22
        %s207 = smul.u32 16, %s22
        %v208 = vld [vmem:[%s168] sm:$0xff]
        %v209 = vld [vmem:[%s168 + $0x8] sm:$0xff]
        %v210 = vld [vmem:[%s168 + $0x10] sm:$0xff]
        %v211 = vld [vmem:[%s168 + $0x18] sm:$0xff]
        %v212 = vld [vmem:[%s168 + $0x20] sm:$0xff]
        %v213 = vld [vmem:[%s168 + $0x28] sm:$0xff]
        %v214 = vld [vmem:[%s168 + $0x30] sm:$0xff]
        %v215 = vld [vmem:[%s168 + $0x38] sm:$0xff]
        %v216 = vld [vmem:[%s168 + $0x40] sm:$0xff]
        %v217 = vld [vmem:[%s168 + $0x48] sm:$0xff]
        %v218 = vld [vmem:[%s168 + $0x50] sm:$0xff]
        %v219 = vld [vmem:[%s168 + $0x58] sm:$0xff]
        %v220 = vld [vmem:[%s168 + $0x60] sm:$0xff]
        %v221 = vld [vmem:[%s168 + $0x68] sm:$0xff]
        %v222 = vld [vmem:[%s168 + $0x70] sm:$0xff]
        %v223 = vld [vmem:[%s168 + $0x78] sm:$0xff]
        %v224 = vld [vmem:[%s178] sm:$0x1]
        %v225 = vld [vmem:[%s178 + $0x1] sm:$0x1]
        %v226 = vld [vmem:[%s178 + $0x2] sm:$0x1]
        %v227 = vld [vmem:[%s178 + $0x3] sm:$0x1]
        %v228 = vld [vmem:[%s178 + $0x4] sm:$0x1]
        %v229 = vld [vmem:[%s178 + $0x5] sm:$0x1]
        %v230 = vld [vmem:[%s178 + $0x6] sm:$0x1]
        %v231 = vld [vmem:[%s178 + $0x7] sm:$0x1]
        %v232 = vld [vmem:[%s178 + $0x8] sm:$0x1]
        %v233 = vld [vmem:[%s178 + $0x9] sm:$0x1]
        %v234 = vld [vmem:[%s178 + $0xa] sm:$0x1]
        %v235 = vld [vmem:[%s178 + $0xb] sm:$0x1]
        %v236 = vld [vmem:[%s178 + $0xc] sm:$0x1]
        %v237 = vld [vmem:[%s178 + $0xd] sm:$0x1]
        %v238 = vld [vmem:[%s178 + $0xe] sm:$0x1]
        %v239 = vld [vmem:[%s178 + $0xf] sm:$0x1]
        %v256 = vperm.slane %v224, 0
        %v257 = vperm.slane %v225, 0
        %v258 = vperm.slane %v226, 0
        %v259 = vperm.slane %v227, 0
        %v260 = vperm.slane %v228, 0
        %v261 = vperm.slane %v229, 0
        %v262 = vperm.slane %v230, 0
        %v263 = vperm.slane %v231, 0
        %v264 = vperm.slane %v232, 0
        %v265 = vperm.slane %v233, 0
        %v266 = vperm.slane %v234, 0
        %v267 = vperm.slane %v235, 0
        %v268 = vperm.slane %v236, 0
        %v269 = vperm.slane %v237, 0
        %v270 = vperm.slane %v238, 0
        %v271 = vperm.slane %v239, 0
        %v288 = vadd.f32 %v208, %v256
        %v289 = vadd.f32 %v209, %v257
        %v290 = vadd.f32 %v210, %v258
        %v291 = vadd.f32 %v211, %v259
        %v292 = vadd.f32 %v212, %v260
        %v293 = vadd.f32 %v213, %v261
        %v294 = vadd.f32 %v214, %v262
        %v295 = vadd.f32 %v215, %v263
        %v296 = vadd.f32 %v216, %v264
        %v297 = vadd.f32 %v217, %v265
        %v298 = vadd.f32 %v218, %v266
        %v299 = vadd.f32 %v219, %v267
        %v300 = vadd.f32 %v220, %v268
        %v301 = vadd.f32 %v221, %v269
        %v302 = vadd.f32 %v222, %v270
        %v303 = vadd.f32 %v223, %v271
        %304 = vst [vmem:[%s204] sm:$0xff] %v288
        %305 = vst [vmem:[%s204 + $0x8] sm:$0xff] %v289
        %306 = vst [vmem:[%s204 + $0x10] sm:$0xff] %v290
        %307 = vst [vmem:[%s204 + $0x18] sm:$0xff] %v291
        %308 = vst [vmem:[%s204 + $0x20] sm:$0xff] %v292
        %309 = vst [vmem:[%s204 + $0x28] sm:$0xff] %v293
        %310 = vst [vmem:[%s204 + $0x30] sm:$0xff] %v294
        %311 = vst [vmem:[%s204 + $0x38] sm:$0xff] %v295
        %312 = vst [vmem:[%s204 + $0x40] sm:$0xff] %v296
        %313 = vst [vmem:[%s204 + $0x48] sm:$0xff] %v297
        %314 = vst [vmem:[%s204 + $0x50] sm:$0xff] %v298
        %315 = vst [vmem:[%s204 + $0x58] sm:$0xff] %v299
        %316 = vst [vmem:[%s204 + $0x60] sm:$0xff] %v300
        %317 = vst [vmem:[%s204 + $0x68] sm:$0xff] %v301
        %318 = vst [vmem:[%s204 + $0x70] sm:$0xff] %v302
        %319 = vst [vmem:[%s204 + $0x78] sm:$0xff] %v303
        %s320 = sand.u32 %s82, 1
        %s321 = scalar_lea.sflag [#allocation4], %s320
        %s322 = sand.u32 %s82, 1
        %s323 = smul.addr %s322, 128
        %s324 = scalar_lea.vmem [#allocation7], %s323
        // Predicated region
        $region37: #{tpu_custom_call.1} parent=27 // pred_check
          %p325 = pneg %p92
        $region38: #{tpu_custom_call.1} parent=27 // pred_check_branch
          %327 = sbr.rel (%p325) target = $region40
        $region39: #{tpu_custom_call.1} parent=27 // pred_region
          %s328 = smul.u32 16, %s22
          %330 = vsyncadd %s321, 0
          %s331 = smul.addr %s328, 8
          %s332 = scalar_lea.hbm %s2, %s331
          %s333 = sshll.u32 %s324, 4
          %s334 = int_to_ptr.vmem [resolvable:$true] %s333
          %s335 = sshll.u32 %s332, 4
          %s336 = int_to_ptr.hbm [resolvable:$true] %s335
          %341 = dma.vmem_to_hbm [thread:$0]  %s334, 2048, %s336, %s321, 128, 128, 8
        $region40: #{tpu_custom_call.1} parent=27 // pred_fallthru
          _
      $region28: #{tpu_custom_call.1} parent=5 // pred_fallthru
        _
      %p342 = scmp.le.s32.totalorder 2, %s17
      // Predicated region
      $region41: #{tpu_custom_call.1} parent=5 // pred_check
        %p343 = pneg %p342
      $region42: #{tpu_custom_call.1} parent=5 // pred_check_branch
        %345 = sbr.rel (%p343) target = $region44
      $region43: #{tpu_custom_call.1} parent=5 // pred_region
        %s346 = ssub.s32 %s17, 2
        // Predicated region
        $region45: #{tpu_custom_call.1} parent=43 // pred_check
          %p347 = pneg %p98
        $region46: #{tpu_custom_call.1} parent=43 // pred_check_branch
          %349 = sbr.rel (%p347) target = $region48
        $region47: #{tpu_custom_call.1} parent=43 // pred_region
          %s350 = sand.u32 %s83, 1
          %s351 = scalar_lea.sflag [#allocation4], %s350
          %s352 = sand.u32 %s83, 1
          %s353 = smul.addr %s352, 128
          %s354 = scalar_lea.vmem [#allocation7], %s353
          %356 = dma.done %s351, 2048
        $region48: #{tpu_custom_call.1} parent=43 // pred_fallthru
          _
      $region44: #{tpu_custom_call.1} parent=5 // pred_fallthru
        _
    $region6: #{tpu_custom_call.1} parent=1 // loop_footer
      %s21 = sadd.s32 1, %s17
    $region7: #{tpu_custom_call.1} parent=1 // loop_footer_branch
      %16 = sbr.rel target = $region3
    $region8: #{tpu_custom_call.1} parent=1 // loop_exit
      _
    %357 = vsyncpa [#allocation3], 1
    %s358 = scalar_lea.sflag [#allocation3], 1
    %359 = vsyncpa %s358, 1
    %360 = vsyncpa [#allocation6], 1
    %s361 = scalar_lea.sflag [#allocation6], 1
    %362 = vsyncpa %s361, 1
    %363 = vsyncpa [#allocation4], 1
    %s364 = scalar_lea.sflag [#allocation4], 1
    %365 = vsyncpa %s364, 1

</llo_original>
